<compile_context>
chip_gen: v5e
topology: v5e:2x2
jax: 0.10.0
libtpu: 0.0.40
codegen_flags: <defaults>
</compile_context>

<pallas_src>
import jax
import jax.numpy as jnp
from jax import lax
from jax.experimental import pallas as pl
from jax.experimental.pallas import tpu as pltpu


# ----------------------------------------------------------------------------
# Generation-aware sizing
# ----------------------------------------------------------------------------
def _vmem_budget_bytes():
    """(working-set budget, vmem_limit_bytes) with headroom per generation."""
    try:
        cap = pltpu.get_tpu_info().vmem_capacity_bytes
    except Exception:
        cap = 64 << 20  # conservative: v7x per-TensorCore capacity
    budget = int(min(cap // 4, 32 << 20))      # keep double-buffering alive
    limit = int(min(cap // 2, 64 << 20))       # scoped VMEM limit we request
    return budget, limit


def _pick_time_block(t, b, d, h, budget_bytes):
    """Largest time block whose (double-buffered) blocks fit the VMEM budget."""
    # Per-timestep bytes (x2 for pipeline double-buffering):
    #   x block (b*d), xp scratch (b*h), h_out block (b*h), o_out block (b*h)
    per_tb = 2 * b * (d + 3 * h) * 4
    # Resident weights / biases / hidden carry (counted x2 to be safe).
    fixed = 2 * (d * h + 2 * h * h + 2 * h + b * h) * 4
    avail = max(budget_bytes - fixed, per_tb)
    tb = int(avail // per_tb)
    return max(1, min(tb, t, 256))


# ----------------------------------------------------------------------------
# Fused kernel: per time block, (1) input-projection GEMM, (2) serial
# recurrence over dense (B, H) slabs, (3) output-projection GEMM.
# ----------------------------------------------------------------------------
def _rnn_fused_kernel(x_ref, wi_ref, bi_ref, wh_ref, wo_ref, bo_ref,
                      h_out_ref, o_out_ref, xp_ref, h_carry):
    # First time block of the sequence -> reset the hidden-state carry.
    @pl.when(pl.program_id(0) == 0)
    def _():
        h_carry[...] = jnp.zeros_like(h_carry)

    tb = x_ref.shape[0]

    # (1) Hoisted input projection for the whole block: one MXU GEMM contracting
    #     D, keeping (tb, B) leading dims. (b_i2h + b_h2h) is folded into bi.
    xp_ref[...] = lax.dot_general(
        x_ref[...], wi_ref[...],
        (((2,), (0,)), ((), ())),
        preferred_element_type=jnp.float32,
    ) + bi_ref[...]

    # (2) Serial recurrence, time-major: each step reads/writes a dense (B, H)
    #     slab (no sublane-strided gathers, no masked partial stores).
    wh = wh_ref[...]

    def step(i, h):
        pre = xp_ref[i] + jnp.dot(h, wh, preferred_element_type=jnp.float32)
        h = jnp.maximum(pre, 0.0)                 # ReLU
        h_out_ref[i] = h.astype(h_out_ref.dtype)
        return h

    h_carry[...] = lax.fori_loop(0, tb, step, h_carry[...],
                                 unroll=min(tb, 8))

    # (3) Fused output projection (independent of the h-carry chain): one GEMM
    #     over the whole block -> fills MXU slack of the latency-bound loop.
    o_out_ref[...] = (lax.dot_general(
        h_out_ref[...].astype(jnp.float32), wo_ref[...],
        (((2,), (0,)), ((), ())),
        preferred_element_type=jnp.float32,
    ) + bo_ref[...]).astype(o_out_ref.dtype)


# ----------------------------------------------------------------------------
# Full forward pass
# ----------------------------------------------------------------------------
@jax.jit
def rnn_forward(sequence, w_i2h, b_i2h, w_h2h, b_h2h, w_out, b_out):
    """sequence: (B, T, D) float32. Weights in PyTorch (out, in) layout."""
    b, t, d = sequence.shape
    h_dim = w_i2h.shape[0]
    dtype = sequence.dtype

    # (in, out) layouts; the two recurrent biases are pre-summed.
    wi = w_i2h.T                                  # (D, H)
    wh = w_h2h.T                                  # (H, H)
    wo = w_out.T                                  # (H, H)
    b_in = (b_i2h + b_h2h).reshape(1, h_dim)
    bo = b_out.reshape(1, h_dim)

    budget, vmem_limit = _vmem_budget_bytes()
    tb = _pick_time_block(t, b, d, h_dim, budget)
    t_pad = ((t + tb - 1) // tb) * tb

    # Time-major layout so per-step slices in the kernel are dense (B, *) slabs.
    x_tm = jnp.swapaxes(sequence, 0, 1)           # (T, B, D)
    if t_pad != t:
        x_tm = jnp.pad(x_tm, ((0, t_pad - t), (0, 0), (0, 0)))

    # TODO(synk): for very large hidden_dim, tile Wh/Wo (N-tiling + K-reduction
    #             accumulator) instead of keeping them fully VMEM-resident.
    # TODO(synk): on v7x, shard the batch across the 2 TensorCores with a
    #             CORE_PARALLEL batch grid axis; single-TC parts keep 1 shard.
    h_tm, o_tm = pl.pallas_call(
        _rnn_fused_kernel,
        out_shape=(jax.ShapeDtypeStruct((t_pad, b, h_dim), dtype),
                   jax.ShapeDtypeStruct((t_pad, b, h_dim), dtype)),
        grid_spec=pltpu.PrefetchScalarGridSpec(
            num_scalar_prefetch=0,
            grid=(t_pad // tb,),
            in_specs=[
                pl.BlockSpec((tb, b, d), lambda ti: (ti, 0, 0)),     # x block
                pl.BlockSpec((d, h_dim), lambda ti: (0, 0)),         # Wi
                pl.BlockSpec((1, h_dim), lambda ti: (0, 0)),         # b_i2h+b_h2h
                pl.BlockSpec((h_dim, h_dim), lambda ti: (0, 0)),     # Wh
                pl.BlockSpec((h_dim, h_dim), lambda ti: (0, 0)),     # Wo
                pl.BlockSpec((1, h_dim), lambda ti: (0, 0)),         # b_out
            ],
            out_specs=[
                pl.BlockSpec((tb, b, h_dim), lambda ti: (ti, 0, 0)),  # hidden
                pl.BlockSpec((tb, b, h_dim), lambda ti: (ti, 0, 0)),  # output
            ],
            scratch_shapes=[
                pltpu.VMEM((tb, b, h_dim), jnp.float32),              # xp block
                pltpu.VMEM((b, h_dim), jnp.float32),                  # h carry
            ],
        ),
        compiler_params=pltpu.CompilerParams(
            dimension_semantics=("arbitrary",),   # serial h-carry over time
            vmem_limit_bytes=vmem_limit,
        ),
    )(x_tm, wi, b_in, wh, wo, bo)

    h_all = jnp.swapaxes(h_tm[:t], 0, 1)          # (B, T, H)
    o_all = jnp.swapaxes(o_tm[:t], 0, 1)          # (B, T, H)
    return h_all, o_all


# ----------------------------------------------------------------------------
# Pure-JAX reference mirroring the PyTorch loop
# ----------------------------------------------------------------------------
def _reference(sequence, w_i2h, b_i2h, w_h2h, b_h2h, w_out, b_out):
    B, T, D = sequence.shape
    H = w_i2h.shape[0]
    h = jnp.zeros((B, H), jnp.float32)
    hs, os_ = [], []
    for i in range(T):
        x = sequence[:, i, :]
        h = jnp.maximum(x @ w_i2h.T + b_i2h + h @ w_h2h.T + b_h2h, 0.0)
        o = h @ w_out.T + b_out
        hs.append(h)
        os_.append(o)
    return jnp.stack(hs, axis=1), jnp.stack(os_, axis=1)


def _linear_init(key, out_dim, in_dim):
    """Deterministic PyTorch-style nn.Linear init: U(-1/sqrt(in), 1/sqrt(in))."""
    kw, kb = jax.random.split(key)
    bound = 1.0 / jnp.sqrt(jnp.float32(in_dim))
    w = jax.random.uniform(kw, (out_dim, in_dim), jnp.float32, -bound, bound)
    b = jax.random.uniform(kb, (out_dim,), jnp.float32, -bound, bound)
    return w, b


if __name__ == "__main__":
    key = jax.random.PRNGKey(0)
    B, T, D, H = 2, 8, 4, 32

    k_seq, k_i2h, k_h2h, k_out = jax.random.split(key, 4)
    sequence = jax.random.normal(k_seq, (B, T, D), jnp.float32)
    w_i2h, b_i2h = _linear_init(k_i2h, H, D)
    w_h2h, b_h2h = _linear_init(k_h2h, H, H)
    w_out, b_out = _linear_init(k_out, H, H)

    hidden, output = rnn_forward(sequence, w_i2h, b_i2h, w_h2h, b_h2h,
                                 w_out, b_out)
    jax.block_until_ready((hidden, output))

    h_ref, o_ref = _reference(sequence, w_i2h, b_i2h, w_h2h, b_h2h,
                              w_out, b_out)
    assert hidden.shape == (B, T, H) and output.shape == (B, T, H)
    assert jnp.allclose(hidden, h_ref, atol=1e-5, rtol=1e-5)
    assert jnp.allclose(output, o_ref, atol=1e-5, rtol=1e-5)

    print("KERNEL_OK")
</pallas_src>

<mosaic_0001>
module attributes {stable_mosaic.version = 11 : i64} {
  func.func @_rnn_fused_kernel(%arg0: i32, %arg1: memref<8x2x4xf32, #tpu.memory_space<vmem>>, %arg2: memref<4x32xf32, #tpu.memory_space<vmem>>, %arg3: memref<1x32xf32, #tpu.memory_space<vmem>>, %arg4: memref<32x32xf32, #tpu.memory_space<vmem>>, %arg5: memref<32x32xf32, #tpu.memory_space<vmem>>, %arg6: memref<1x32xf32, #tpu.memory_space<vmem>>, %arg7: memref<8x2x32xf32, #tpu.memory_space<vmem>>, %arg8: memref<8x2x32xf32, #tpu.memory_space<vmem>>, %arg9: memref<8x2x32xf32, #tpu.memory_space<vmem>>, %arg10: memref<2x32xf32, #tpu.memory_space<vmem>>) attributes {dimension_semantics = [#tpu.dimension_semantics<arbitrary>], iteration_bounds = array<i64: 1>, scalar_prefetch = 0 : i64, scratch_operands = 2 : i64, tpu.core_type = #tpu.core_type<tc>, window_params = [{transform_indices = @transform_0, window_bounds = array<i64: 8, 2, 4>}, {pipeline_mode = #tpu.pipeline_mode<synchronous>, transform_indices = @transform_1, window_bounds = array<i64: 4, 32>}, {pipeline_mode = #tpu.pipeline_mode<synchronous>, transform_indices = @transform_2, window_bounds = array<i64: 1, 32>}, {pipeline_mode = #tpu.pipeline_mode<synchronous>, transform_indices = @transform_3, window_bounds = array<i64: 32, 32>}, {pipeline_mode = #tpu.pipeline_mode<synchronous>, transform_indices = @transform_4, window_bounds = array<i64: 32, 32>}, {pipeline_mode = #tpu.pipeline_mode<synchronous>, transform_indices = @transform_5, window_bounds = array<i64: 1, 32>}, {transform_indices = @transform_6, window_bounds = array<i64: 8, 2, 32>}, {transform_indices = @transform_7, window_bounds = array<i64: 8, 2, 32>}]} {
    %c0_i32 = arith.constant 0 : i32
    %0 = arith.cmpi eq, %arg0, %c0_i32 : i32
    %1 = arith.extui %0 : i1 to i32
    %c0_i32_0 = arith.constant 0 : i32
    %2 = arith.cmpi ne, %1, %c0_i32_0 : i32
    scf.if %2 {
      %cst_76 = arith.constant 0.000000e+00 : f32
      %110 = vector.broadcast %cst_76 : f32 to vector<2x32xf32>
      %c0_77 = arith.constant 0 : index
      %c0_78 = arith.constant 0 : index
      %111 = vector.load %arg10[%c0_77, %c0_78] : memref<2x32xf32, #tpu.memory_space<vmem>>, vector<2x32xf32>
      tpu.vector_store %arg10[%c0_77, %c0_78], %110 {strides = array<i32>} : memref<2x32xf32, #tpu.memory_space<vmem>>, vector<2x32xf32>,
    } else {
    }
    %c0 = arith.constant 0 : index
    %c0_1 = arith.constant 0 : index
    %c0_2 = arith.constant 0 : index
    %3 = vector.load %arg1[%c0, %c0_1, %c0_2] : memref<8x2x4xf32, #tpu.memory_space<vmem>>, vector<8x2x4xf32>
    %c0_3 = arith.constant 0 : index
    %c0_4 = arith.constant 0 : index
    %4 = vector.load %arg2[%c0_3, %c0_4] : memref<4x32xf32, #tpu.memory_space<vmem>>, vector<4x32xf32>
    %cst = arith.constant dense<0.000000e+00> : vector<8x2x32xf32>
    %5 = tpu.matmul %3, %4, %cst {dimension_numbers = #tpu.dot_dimension_numbers<[2], [0], [0, 1], [1], [0, 0, 0, 1, 1, 1], [], []>} : vector<8x2x4xf32>, vector<4x32xf32>, vector<8x2x32xf32> -> vector<8x2x32xf32>
    %c0_5 = arith.constant 0 : index
    %c0_6 = arith.constant 0 : index
    %6 = vector.load %arg3[%c0_5, %c0_6] : memref<1x32xf32, #tpu.memory_space<vmem>>, vector<1x32xf32>
    %7 = vector.shape_cast %6 : vector<1x32xf32> to vector<1x1x32xf32>
    %8 = vector.broadcast %7 : vector<1x1x32xf32> to vector<8x2x32xf32>
    %9 = arith.addf %5, %8 : vector<8x2x32xf32>
    %c0_7 = arith.constant 0 : index
    %c0_8 = arith.constant 0 : index
    %c0_9 = arith.constant 0 : index
    %10 = vector.load %arg9[%c0_7, %c0_8, %c0_9] : memref<8x2x32xf32, #tpu.memory_space<vmem>>, vector<8x2x32xf32>
    tpu.vector_store %arg9[%c0_7, %c0_8, %c0_9], %9 {strides = array<i32>} : memref<8x2x32xf32, #tpu.memory_space<vmem>>, vector<8x2x32xf32>,
    %c0_10 = arith.constant 0 : index
    %c0_11 = arith.constant 0 : index
    %11 = vector.load %arg4[%c0_10, %c0_11] : memref<32x32xf32, #tpu.memory_space<vmem>>, vector<32x32xf32>
    %c0_12 = arith.constant 0 : index
    %c0_13 = arith.constant 0 : index
    %12 = vector.load %arg10[%c0_12, %c0_13] : memref<2x32xf32, #tpu.memory_space<vmem>>, vector<2x32xf32>
    %c0_i32_14 = arith.constant 0 : i32
    %13 = arith.index_cast %c0_i32_14 : i32 to index
    %c0_15 = arith.constant 0 : index
    %c0_16 = arith.constant 0 : index
    %14 = vector.load %arg9[%13, %c0_15, %c0_16] : memref<8x2x32xf32, #tpu.memory_space<vmem>>, vector<1x2x32xf32>
    %15 = vector.shape_cast %14 : vector<1x2x32xf32> to vector<2x32xf32>
    %cst_17 = arith.constant dense<0.000000e+00> : vector<2x32xf32>
    %16 = tpu.matmul %12, %11, %cst_17 {dimension_numbers = #tpu.dot_dimension_numbers<[1], [0], [0], [1], [0, 0, 1, 1], [], []>} : vector<2x32xf32>, vector<32x32xf32>, vector<2x32xf32> -> vector<2x32xf32>
    %17 = arith.addf %15, %16 : vector<2x32xf32>
    %cst_18 = arith.constant 0.000000e+00 : f32
    %18 = vector.broadcast %cst_18 : f32 to vector<2x32xf32>
    %19 = arith.maximumf %17, %18 : vector<2x32xf32>
    %20 = arith.index_cast %c0_i32_14 : i32 to index
    %c0_19 = arith.constant 0 : index
    %c0_20 = arith.constant 0 : index
    %21 = vector.load %arg7[%20, %c0_19, %c0_20] : memref<8x2x32xf32, #tpu.memory_space<vmem>>, vector<1x2x32xf32>
    %22 = vector.shape_cast %21 : vector<1x2x32xf32> to vector<2x32xf32>
    %23 = vector.shape_cast %19 : vector<2x32xf32> to vector<1x2x32xf32>
    tpu.vector_store %arg7[%20, %c0_19, %c0_20], %23 {strides = array<i32>} : memref<8x2x32xf32, #tpu.memory_space<vmem>>, vector<1x2x32xf32>,
    %c1_i32 = arith.constant 1 : i32
    %24 = arith.index_cast %c1_i32 : i32 to index
    %c0_21 = arith.constant 0 : index
    %c0_22 = arith.constant 0 : index
    %25 = vector.load %arg9[%24, %c0_21, %c0_22] : memref<8x2x32xf32, #tpu.memory_space<vmem>>, vector<1x2x32xf32>
    %26 = vector.shape_cast %25 : vector<1x2x32xf32> to vector<2x32xf32>
    %cst_23 = arith.constant dense<0.000000e+00> : vector<2x32xf32>
    %27 = tpu.matmul %19, %11, %cst_23 {dimension_numbers = #tpu.dot_dimension_numbers<[1], [0], [0], [1], [0, 0, 1, 1], [], []>} : vector<2x32xf32>, vector<32x32xf32>, vector<2x32xf32> -> vector<2x32xf32>
    %28 = arith.addf %26, %27 : vector<2x32xf32>
    %cst_24 = arith.constant 0.000000e+00 : f32
    %29 = vector.broadcast %cst_24 : f32 to vector<2x32xf32>
    %30 = arith.maximumf %28, %29 : vector<2x32xf32>
    %31 = arith.index_cast %c1_i32 : i32 to index
    %c0_25 = arith.constant 0 : index
    %c0_26 = arith.constant 0 : index
    %32 = vector.load %arg7[%31, %c0_25, %c0_26] : memref<8x2x32xf32, #tpu.memory_space<vmem>>, vector<1x2x32xf32>
    %33 = vector.shape_cast %32 : vector<1x2x32xf32> to vector<2x32xf32>
    %34 = vector.shape_cast %30 : vector<2x32xf32> to vector<1x2x32xf32>
    tpu.vector_store %arg7[%31, %c0_25, %c0_26], %34 {strides = array<i32>} : memref<8x2x32xf32, #tpu.memory_space<vmem>>, vector<1x2x32xf32>,
    %c2_i32 = arith.constant 2 : i32
    %35 = arith.index_cast %c2_i32 : i32 to index
    %c0_27 = arith.constant 0 : index
    %c0_28 = arith.constant 0 : index
    %36 = vector.load %arg9[%35, %c0_27, %c0_28] : memref<8x2x32xf32, #tpu.memory_space<vmem>>, vector<1x2x32xf32>
    %37 = vector.shape_cast %36 : vector<1x2x32xf32> to vector<2x32xf32>
    %cst_29 = arith.constant dense<0.000000e+00> : vector<2x32xf32>
    %38 = tpu.matmul %30, %11, %cst_29 {dimension_numbers = #tpu.dot_dimension_numbers<[1], [0], [0], [1], [0, 0, 1, 1], [], []>} : vector<2x32xf32>, vector<32x32xf32>, vector<2x32xf32> -> vector<2x32xf32>
    %39 = arith.addf %37, %38 : vector<2x32xf32>
    %cst_30 = arith.constant 0.000000e+00 : f32
    %40 = vector.broadcast %cst_30 : f32 to vector<2x32xf32>
    %41 = arith.maximumf %39, %40 : vector<2x32xf32>
    %42 = arith.index_cast %c2_i32 : i32 to index
    %c0_31 = arith.constant 0 : index
    %c0_32 = arith.constant 0 : index
    %43 = vector.load %arg7[%42, %c0_31, %c0_32] : memref<8x2x32xf32, #tpu.memory_space<vmem>>, vector<1x2x32xf32>
    %44 = vector.shape_cast %43 : vector<1x2x32xf32> to vector<2x32xf32>
    %45 = vector.shape_cast %41 : vector<2x32xf32> to vector<1x2x32xf32>
    tpu.vector_store %arg7[%42, %c0_31, %c0_32], %45 {strides = array<i32>} : memref<8x2x32xf32, #tpu.memory_space<vmem>>, vector<1x2x32xf32>,
    %c3_i32 = arith.constant 3 : i32
    %46 = arith.index_cast %c3_i32 : i32 to index
    %c0_33 = arith.constant 0 : index
    %c0_34 = arith.constant 0 : index
    %47 = vector.load %arg9[%46, %c0_33, %c0_34] : memref<8x2x32xf32, #tpu.memory_space<vmem>>, vector<1x2x32xf32>
    %48 = vector.shape_cast %47 : vector<1x2x32xf32> to vector<2x32xf32>
    %cst_35 = arith.constant dense<0.000000e+00> : vector<2x32xf32>
    %49 = tpu.matmul %41, %11, %cst_35 {dimension_numbers = #tpu.dot_dimension_numbers<[1], [0], [0], [1], [0, 0, 1, 1], [], []>} : vector<2x32xf32>, vector<32x32xf32>, vector<2x32xf32> -> vector<2x32xf32>
    %50 = arith.addf %48, %49 : vector<2x32xf32>
    %cst_36 = arith.constant 0.000000e+00 : f32
    %51 = vector.broadcast %cst_36 : f32 to vector<2x32xf32>
    %52 = arith.maximumf %50, %51 : vector<2x32xf32>
    %53 = arith.index_cast %c3_i32 : i32 to index
    %c0_37 = arith.constant 0 : index
    %c0_38 = arith.constant 0 : index
    %54 = vector.load %arg7[%53, %c0_37, %c0_38] : memref<8x2x32xf32, #tpu.memory_space<vmem>>, vector<1x2x32xf32>
    %55 = vector.shape_cast %54 : vector<1x2x32xf32> to vector<2x32xf32>
    %56 = vector.shape_cast %52 : vector<2x32xf32> to vector<1x2x32xf32>
    tpu.vector_store %arg7[%53, %c0_37, %c0_38], %56 {strides = array<i32>} : memref<8x2x32xf32, #tpu.memory_space<vmem>>, vector<1x2x32xf32>,
    %c4_i32 = arith.constant 4 : i32
    %57 = arith.index_cast %c4_i32 : i32 to index
    %c0_39 = arith.constant 0 : index
    %c0_40 = arith.constant 0 : index
    %58 = vector.load %arg9[%57, %c0_39, %c0_40] : memref<8x2x32xf32, #tpu.memory_space<vmem>>, vector<1x2x32xf32>
    %59 = vector.shape_cast %58 : vector<1x2x32xf32> to vector<2x32xf32>
    %cst_41 = arith.constant dense<0.000000e+00> : vector<2x32xf32>
    %60 = tpu.matmul %52, %11, %cst_41 {dimension_numbers = #tpu.dot_dimension_numbers<[1], [0], [0], [1], [0, 0, 1, 1], [], []>} : vector<2x32xf32>, vector<32x32xf32>, vector<2x32xf32> -> vector<2x32xf32>
    %61 = arith.addf %59, %60 : vector<2x32xf32>
    %cst_42 = arith.constant 0.000000e+00 : f32
    %62 = vector.broadcast %cst_42 : f32 to vector<2x32xf32>
    %63 = arith.maximumf %61, %62 : vector<2x32xf32>
    %64 = arith.index_cast %c4_i32 : i32 to index
    %c0_43 = arith.constant 0 : index
    %c0_44 = arith.constant 0 : index
    %65 = vector.load %arg7[%64, %c0_43, %c0_44] : memref<8x2x32xf32, #tpu.memory_space<vmem>>, vector<1x2x32xf32>
    %66 = vector.shape_cast %65 : vector<1x2x32xf32> to vector<2x32xf32>
    %67 = vector.shape_cast %63 : vector<2x32xf32> to vector<1x2x32xf32>
    tpu.vector_store %arg7[%64, %c0_43, %c0_44], %67 {strides = array<i32>} : memref<8x2x32xf32, #tpu.memory_space<vmem>>, vector<1x2x32xf32>,
    %c5_i32 = arith.constant 5 : i32
    %68 = arith.index_cast %c5_i32 : i32 to index
    %c0_45 = arith.constant 0 : index
    %c0_46 = arith.constant 0 : index
    %69 = vector.load %arg9[%68, %c0_45, %c0_46] : memref<8x2x32xf32, #tpu.memory_space<vmem>>, vector<1x2x32xf32>
    %70 = vector.shape_cast %69 : vector<1x2x32xf32> to vector<2x32xf32>
    %cst_47 = arith.constant dense<0.000000e+00> : vector<2x32xf32>
    %71 = tpu.matmul %63, %11, %cst_47 {dimension_numbers = #tpu.dot_dimension_numbers<[1], [0], [0], [1], [0, 0, 1, 1], [], []>} : vector<2x32xf32>, vector<32x32xf32>, vector<2x32xf32> -> vector<2x32xf32>
    %72 = arith.addf %70, %71 : vector<2x32xf32>
    %cst_48 = arith.constant 0.000000e+00 : f32
    %73 = vector.broadcast %cst_48 : f32 to vector<2x32xf32>
    %74 = arith.maximumf %72, %73 : vector<2x32xf32>
    %75 = arith.index_cast %c5_i32 : i32 to index
    %c0_49 = arith.constant 0 : index
    %c0_50 = arith.constant 0 : index
    %76 = vector.load %arg7[%75, %c0_49, %c0_50] : memref<8x2x32xf32, #tpu.memory_space<vmem>>, vector<1x2x32xf32>
    %77 = vector.shape_cast %76 : vector<1x2x32xf32> to vector<2x32xf32>
    %78 = vector.shape_cast %74 : vector<2x32xf32> to vector<1x2x32xf32>
    tpu.vector_store %arg7[%75, %c0_49, %c0_50], %78 {strides = array<i32>} : memref<8x2x32xf32, #tpu.memory_space<vmem>>, vector<1x2x32xf32>,
    %c6_i32 = arith.constant 6 : i32
    %79 = arith.index_cast %c6_i32 : i32 to index
    %c0_51 = arith.constant 0 : index
    %c0_52 = arith.constant 0 : index
    %80 = vector.load %arg9[%79, %c0_51, %c0_52] : memref<8x2x32xf32, #tpu.memory_space<vmem>>, vector<1x2x32xf32>
    %81 = vector.shape_cast %80 : vector<1x2x32xf32> to vector<2x32xf32>
    %cst_53 = arith.constant dense<0.000000e+00> : vector<2x32xf32>
    %82 = tpu.matmul %74, %11, %cst_53 {dimension_numbers = #tpu.dot_dimension_numbers<[1], [0], [0], [1], [0, 0, 1, 1], [], []>} : vector<2x32xf32>, vector<32x32xf32>, vector<2x32xf32> -> vector<2x32xf32>
    %83 = arith.addf %81, %82 : vector<2x32xf32>
    %cst_54 = arith.constant 0.000000e+00 : f32
    %84 = vector.broadcast %cst_54 : f32 to vector<2x32xf32>
    %85 = arith.maximumf %83, %84 : vector<2x32xf32>
    %86 = arith.index_cast %c6_i32 : i32 to index
    %c0_55 = arith.constant 0 : index
    %c0_56 = arith.constant 0 : index
    %87 = vector.load %arg7[%86, %c0_55, %c0_56] : memref<8x2x32xf32, #tpu.memory_space<vmem>>, vector<1x2x32xf32>
    %88 = vector.shape_cast %87 : vector<1x2x32xf32> to vector<2x32xf32>
    %89 = vector.shape_cast %85 : vector<2x32xf32> to vector<1x2x32xf32>
    tpu.vector_store %arg7[%86, %c0_55, %c0_56], %89 {strides = array<i32>} : memref<8x2x32xf32, #tpu.memory_space<vmem>>, vector<1x2x32xf32>,
    %c7_i32 = arith.constant 7 : i32
    %90 = arith.index_cast %c7_i32 : i32 to index
    %c0_57 = arith.constant 0 : index
    %c0_58 = arith.constant 0 : index
    %91 = vector.load %arg9[%90, %c0_57, %c0_58] : memref<8x2x32xf32, #tpu.memory_space<vmem>>, vector<1x2x32xf32>
    %92 = vector.shape_cast %91 : vector<1x2x32xf32> to vector<2x32xf32>
    %cst_59 = arith.constant dense<0.000000e+00> : vector<2x32xf32>
    %93 = tpu.matmul %85, %11, %cst_59 {dimension_numbers = #tpu.dot_dimension_numbers<[1], [0], [0], [1], [0, 0, 1, 1], [], []>} : vector<2x32xf32>, vector<32x32xf32>, vector<2x32xf32> -> vector<2x32xf32>
    %94 = arith.addf %92, %93 : vector<2x32xf32>
    %cst_60 = arith.constant 0.000000e+00 : f32
    %95 = vector.broadcast %cst_60 : f32 to vector<2x32xf32>
    %96 = arith.maximumf %94, %95 : vector<2x32xf32>
    %97 = arith.index_cast %c7_i32 : i32 to index
    %c0_61 = arith.constant 0 : index
    %c0_62 = arith.constant 0 : index
    %98 = vector.load %arg7[%97, %c0_61, %c0_62] : memref<8x2x32xf32, #tpu.memory_space<vmem>>, vector<1x2x32xf32>
    %99 = vector.shape_cast %98 : vector<1x2x32xf32> to vector<2x32xf32>
    %100 = vector.shape_cast %96 : vector<2x32xf32> to vector<1x2x32xf32>
    tpu.vector_store %arg7[%97, %c0_61, %c0_62], %100 {strides = array<i32>} : memref<8x2x32xf32, #tpu.memory_space<vmem>>, vector<1x2x32xf32>,
    %c8_i32 = arith.constant 8 : i32
    %c0_63 = arith.constant 0 : index
    %c0_64 = arith.constant 0 : index
    %101 = vector.load %arg10[%c0_63, %c0_64] : memref<2x32xf32, #tpu.memory_space<vmem>>, vector<2x32xf32>
    tpu.vector_store %arg10[%c0_63, %c0_64], %96 {strides = array<i32>} : memref<2x32xf32, #tpu.memory_space<vmem>>, vector<2x32xf32>,
    %c0_65 = arith.constant 0 : index
    %c0_66 = arith.constant 0 : index
    %c0_67 = arith.constant 0 : index
    %102 = vector.load %arg7[%c0_65, %c0_66, %c0_67] : memref<8x2x32xf32, #tpu.memory_space<vmem>>, vector<8x2x32xf32>
    %c0_68 = arith.constant 0 : index
    %c0_69 = arith.constant 0 : index
    %103 = vector.load %arg5[%c0_68, %c0_69] : memref<32x32xf32, #tpu.memory_space<vmem>>, vector<32x32xf32>
    %cst_70 = arith.constant dense<0.000000e+00> : vector<8x2x32xf32>
    %104 = tpu.matmul %102, %103, %cst_70 {dimension_numbers = #tpu.dot_dimension_numbers<[2], [0], [0, 1], [1], [0, 0, 0, 1, 1, 1], [], []>} : vector<8x2x32xf32>, vector<32x32xf32>, vector<8x2x32xf32> -> vector<8x2x32xf32>
    %c0_71 = arith.constant 0 : index
    %c0_72 = arith.constant 0 : index
    %105 = vector.load %arg6[%c0_71, %c0_72] : memref<1x32xf32, #tpu.memory_space<vmem>>, vector<1x32xf32>
    %106 = vector.shape_cast %105 : vector<1x32xf32> to vector<1x1x32xf32>
    %107 = vector.broadcast %106 : vector<1x1x32xf32> to vector<8x2x32xf32>
    %108 = arith.addf %104, %107 : vector<8x2x32xf32>
    %c0_73 = arith.constant 0 : index
    %c0_74 = arith.constant 0 : index
    %c0_75 = arith.constant 0 : index
    %109 = vector.load %arg8[%c0_73, %c0_74, %c0_75] : memref<8x2x32xf32, #tpu.memory_space<vmem>>, vector<8x2x32xf32>
    tpu.vector_store %arg8[%c0_73, %c0_74, %c0_75], %108 {strides = array<i32>} : memref<8x2x32xf32, #tpu.memory_space<vmem>>, vector<8x2x32xf32>,
    return
  }
  func.func @transform_0(%arg0: i32) -> (i32, i32, i32) {
    %c0_i32 = arith.constant 0 : i32
    %c0_i32_0 = arith.constant 0 : i32
    %c0_i32_1 = arith.constant 0 : i32
    return %arg0, %c0_i32, %c0_i32_0 : i32, i32, i32
  }
  func.func @transform_1(%arg0: i32) -> (i32, i32) {
    %c0_i32 = arith.constant 0 : i32
    %c0_i32_0 = arith.constant 0 : i32
    %c0_i32_1 = arith.constant 0 : i32
    return %c0_i32, %c0_i32_0 : i32, i32
  }
  func.func @transform_2(%arg0: i32) -> (i32, i32) {
    %c0_i32 = arith.constant 0 : i32
    %c0_i32_0 = arith.constant 0 : i32
    %c0_i32_1 = arith.constant 0 : i32
    return %c0_i32, %c0_i32_0 : i32, i32
  }
  func.func @transform_3(%arg0: i32) -> (i32, i32) {
    %c0_i32 = arith.constant 0 : i32
    %c0_i32_0 = arith.constant 0 : i32
    %c0_i32_1 = arith.constant 0 : i32
    return %c0_i32, %c0_i32_0 : i32, i32
  }
  func.func @transform_4(%arg0: i32) -> (i32, i32) {
    %c0_i32 = arith.constant 0 : i32
    %c0_i32_0 = arith.constant 0 : i32
    %c0_i32_1 = arith.constant 0 : i32
    return %c0_i32, %c0_i32_0 : i32, i32
  }
  func.func @transform_5(%arg0: i32) -> (i32, i32) {
    %c0_i32 = arith.constant 0 : i32
    %c0_i32_0 = arith.constant 0 : i32
    %c0_i32_1 = arith.constant 0 : i32
    return %c0_i32, %c0_i32_0 : i32, i32
  }
  func.func @transform_6(%arg0: i32) -> (i32, i32, i32) {
    %c0_i32 = arith.constant 0 : i32
    %c0_i32_0 = arith.constant 0 : i32
    %c0_i32_1 = arith.constant 0 : i32
    return %arg0, %c0_i32, %c0_i32_0 : i32, i32, i32
  }
  func.func @transform_7(%arg0: i32) -> (i32, i32, i32) {
    %c0_i32 = arith.constant 0 : i32
    %c0_i32_0 = arith.constant 0 : i32
    %c0_i32_1 = arith.constant 0 : i32
    return %arg0, %c0_i32, %c0_i32_0 : i32, i32, i32
  }
}

</mosaic_0001>

<llo_original>
// kernel: rnn_forward.1
$region0: #{rnn_forward.1}
  #allocation0 [shape = 'u32[]', space=smem, size = 0x4, offset = 0x4, fixed_abs, tag = 'smem constant byte address 0x4 - core index']
  #allocation1 [shape = 'u32[72,128]{1,0:T(1,128)}', space=vmem, size = 0x9000, scoped, tag = 'internal scratch']
  #allocation2 [shape = 'f32[8,2,32]{2,1,0:T(2,128)}', space=vmem, size = 0x2000, scoped, tag = 'scratch operand']
  #allocation3 [shape = 'f32[2,32]{1,0:T(2,128)}', space=vmem, size = 0x400, scoped, tag = 'scratch operand']
  %s0 = inlined_call_operand.vmem [shape: f32[8,2,4], index: 0, kind: input, shape index: {}]
  %s1 = inlined_call_operand.vmem [shape: f32[4,32], index: 1, kind: input, shape index: {}]
  %s2 = inlined_call_operand.vmem [shape: f32[1,32], index: 2, kind: input, shape index: {}]
  %s3 = inlined_call_operand.vmem [shape: f32[32,32], index: 3, kind: input, shape index: {}]
  %s4 = inlined_call_operand.vmem [shape: f32[32,32], index: 4, kind: input, shape index: {}]
  %s5 = inlined_call_operand.vmem [shape: f32[1,32], index: 5, kind: input, shape index: {}]
  %s6 = inlined_call_operand.vmem [shape: f32[8,2,32], index: 6, kind: output, shape index: {0}]
  %s7 = inlined_call_operand.vmem [shape: f32[8,2,32], index: 7, kind: output, shape index: {1}]
  %8 = xla_tuple %s6, %s7
  %s9 = sld [smem:[#allocation0]]
  $region46: #{rnn_forward.1} parent=0
    _
  %s11 = ssub.s32 1, %s9
  %s12 = scalar_select 0, %s11, %s9
  // Predicated region
  $region2: #{rnn_forward.1} parent=0 // pred_check
    _
  $region3: #{rnn_forward.1} parent=0 // pred_check_branch
    %14 = sbr.rel (0) target = $region5
  $region4: #{rnn_forward.1} parent=0 // pred_region
    _
  $region5: #{rnn_forward.1} parent=0 // pred_fallthru
    _
  // Predicated region
  $region6: #{rnn_forward.1} parent=0 // pred_check
    _
  $region7: #{rnn_forward.1} parent=0 // pred_check_branch
    %16 = sbr.rel (0) target = $region9
  $region8: #{rnn_forward.1} parent=0 // pred_region
    _
  $region9: #{rnn_forward.1} parent=0 // pred_fallthru
    _
  // Predicated region
  $region10: #{rnn_forward.1} parent=0 // pred_check
    _
  $region11: #{rnn_forward.1} parent=0 // pred_check_branch
    %18 = sbr.rel (0) target = $region13
  $region12: #{rnn_forward.1} parent=0 // pred_region
    _
  $region13: #{rnn_forward.1} parent=0 // pred_fallthru
    _
  // Predicated region
  $region14: #{rnn_forward.1} parent=0 // pred_check
    _
  $region15: #{rnn_forward.1} parent=0 // pred_check_branch
    %20 = sbr.rel (0) target = $region17
  $region16: #{rnn_forward.1} parent=0 // pred_region
    _
  $region17: #{rnn_forward.1} parent=0 // pred_fallthru
    _
  // Predicated region
  $region18: #{rnn_forward.1} parent=0 // pred_check
    _
  $region19: #{rnn_forward.1} parent=0 // pred_check_branch
    %22 = sbr.rel (0) target = $region21
  $region20: #{rnn_forward.1} parent=0 // pred_region
    _
  $region21: #{rnn_forward.1} parent=0 // pred_fallthru
    _
  // Predicated region
  $region22: #{rnn_forward.1} parent=0 // pred_check
    _
  $region23: #{rnn_forward.1} parent=0 // pred_check_branch
    %24 = sbr.rel (0) target = $region25
  $region24: #{rnn_forward.1} parent=0 // pred_region
    _
  $region25: #{rnn_forward.1} parent=0 // pred_fallthru
    _
  %p25 = scmp.eq.s32.totalorder 0, 0
  // Predicated region
  $region26: #{rnn_forward.1} parent=0 // pred_check
    %p26 = pneg %p25
  $region27: #{rnn_forward.1} parent=0 // pred_check_branch
    %28 = sbr.rel (%p26) target = $region29
  $region28: #{rnn_forward.1} parent=0 // pred_region
    %vm29 = vcmask 254976
    %30 = vst.msk [vmem:[#allocation3] sm:$0x3] %vm29, 0.0
  $region29: #{rnn_forward.1} parent=0 // pred_fallthru
    _
  %v31 = vld [vmem:[%s0] sm:$0x3]
  %v32 = vld [vmem:[%s0 + $0x2] sm:$0x3]
  %v33 = vld [vmem:[%s0 + $0x4] sm:$0x3]
  %v34 = vld [vmem:[%s0 + $0x6] sm:$0x3]
  %v35 = vld [vmem:[%s0 + $0x8] sm:$0x3]
  %v36 = vld [vmem:[%s0 + $0xa] sm:$0x3]
  %v37 = vld [vmem:[%s0 + $0xc] sm:$0x3]
  %v38 = vld [vmem:[%s0 + $0xe] sm:$0x3]
  %v39 = vld [vmem:[%s1] sm:$0xf]
  %v40 = vld [vmem:[%s2] sm:$0x1]
  %v42 = vperm.slane %v40, 0
  %51 = vst [vmem:[#allocation1] ss:$4 sm:$0xff] %v31
  %s52 = scalar_lea.vmem [#allocation1], 1
  %53 = vst [vmem:[%s52] ss:$4 sm:$0xff] %v32
  %s54 = scalar_lea.vmem [#allocation1], 2
  %55 = vst [vmem:[%s54] ss:$4 sm:$0xff] %v33
  %s56 = scalar_lea.vmem [#allocation1], 3
  %57 = vst [vmem:[%s56] ss:$4 sm:$0xff] %v34
  %s58 = scalar_lea.vmem [#allocation1], 32
  %59 = vst [vmem:[%s58] ss:$4 sm:$0xff] %v35
  %s60 = scalar_lea.vmem [#allocation1], 33
  %61 = vst [vmem:[%s60] ss:$4 sm:$0xff] %v36
  %s62 = scalar_lea.vmem [#allocation1], 34
  %63 = vst [vmem:[%s62] ss:$4 sm:$0xff] %v37
  %s64 = scalar_lea.vmem [#allocation1], 35
  %65 = vst [vmem:[%s64] ss:$4 sm:$0xff] %v38
  %v66 = vld.sshfl [vmem:[#allocation1] sm:$0xff pattern:$0x73625140]
  %v67 = vld.sshfl [vmem:[#allocation1 + $0x20] sm:$0xff pattern:$0x73625140]
  %68 = vst [vmem:[#allocation1] ss:$4 sm:$0xff] %v42
  %s69 = scalar_lea.vmem [#allocation1], 1
  %70 = vst [vmem:[%s69] ss:$4 sm:$0xff] %v42
  %s71 = scalar_lea.vmem [#allocation1], 2
  %72 = vst [vmem:[%s71] ss:$4 sm:$0xff] %v42
  %s73 = scalar_lea.vmem [#allocation1], 3
  %74 = vst [vmem:[%s73] ss:$4 sm:$0xff] %v42
  %s75 = scalar_lea.vmem [#allocation1], 32
  %76 = vst [vmem:[%s75] ss:$4 sm:$0xff] %v42
  %s77 = scalar_lea.vmem [#allocation1], 33
  %78 = vst [vmem:[%s77] ss:$4 sm:$0xff] %v42
  %s79 = scalar_lea.vmem [#allocation1], 34
  %80 = vst [vmem:[%s79] ss:$4 sm:$0xff] %v42
  %s81 = scalar_lea.vmem [#allocation1], 35
  %82 = vst [vmem:[%s81] ss:$4 sm:$0xff] %v42
  %v83 = vld.sshfl [vmem:[#allocation1] sm:$0xff pattern:$0x73625140]
  %v84 = vld.sshfl [vmem:[#allocation1 + $0x20] sm:$0xff pattern:$0x73625140]
  %vm87 = vcmask 31744
  %v88 = vsel %vm87, %v66, 0
  %v90 = vsel %vm87, %v67, 0
  %vm92 = vcmask 1043456
  %v94 = vsel %vm92, %v39, 0
  %96 = vmatpush.msra.mxu0 0.0
  %97 = vmatpush.msra.mxu0 0.0
  %98 = vmatpush.msra.mxu0 0.0
  %99 = vmatpush.msra.mxu0 0.0
  %100 = vmatpush.msra.mxu0 0.0
  %101 = vmatpush.msra.mxu0 0.0
  %102 = vmatpush.msra.mxu0 0.0
  %103 = vmatpush.msra.mxu0 0.0
  %104 = vmatpush.msra.mxu0 0.0
  %105 = vmatpush.msra.mxu0 0.0
  %106 = vmatpush.msra.mxu0 0.0
  %107 = vmatpush.msra.mxu0 0.0
  %108 = vmatpush.msra.mxu0 0.0
  %109 = vmatpush.msra.mxu0 0.0
  %110 = vmatpush.msra.mxu0 0.0
  %111 = vmatpush.msra.mxu0 %v94
  %112 = vmatmul.f32.gmra.mxu0 %v88
  %v113 = vpop.f32.mrf.mxu0
  %v114 = vadd.f32 %v83, %v113
  %115 = vmatmul.f32.gmra.mxu0 %v90
  %v116 = vpop.f32.mrf.mxu0
  %v117 = vadd.f32 %v84, %v116
  %118 = vdwg.mxu0
  %v121 = vrot.slane %v114, 2
  %v122 = vrot.slane %v114, 4
  %v123 = vrot.slane %v114, 6
  %v124 = vrot.slane %v117, 2
  %v125 = vrot.slane %v117, 4
  %v126 = vrot.slane %v117, 6
  %vm133 = vcmask 254976
  %134 = vst.msk [vmem:[#allocation2] sm:$0x3] %vm133, %v114
  %135 = vst.msk [vmem:[#allocation2 + $0x2] sm:$0x3] %vm133, %v121
  %136 = vst.msk [vmem:[#allocation2 + $0x4] sm:$0x3] %vm133, %v122
  %137 = vst.msk [vmem:[#allocation2 + $0x6] sm:$0x3] %vm133, %v123
  %138 = vst.msk [vmem:[#allocation2 + $0x8] sm:$0x3] %vm133, %v117
  %139 = vst.msk [vmem:[#allocation2 + $0xa] sm:$0x3] %vm133, %v124
  %140 = vst.msk [vmem:[#allocation2 + $0xc] sm:$0x3] %vm133, %v125
  %141 = vst.msk [vmem:[#allocation2 + $0xe] sm:$0x3] %vm133, %v126
  %v142 = vld [vmem:[%s3] sm:$0xff]
  %v143 = vld [vmem:[%s3 + $0x8] sm:$0xff]
  %v144 = vld [vmem:[%s3 + $0x10] sm:$0xff]
  %v145 = vld [vmem:[%s3 + $0x18] sm:$0xff]
  %v146 = vld [vmem:[#allocation3] sm:$0x3]
  %v147 = vld [vmem:[#allocation2] sm:$0x3]
  %vm148 = vcmask 261120
  %v150 = vsel %vm148, %v146, 0
  %152 = vmatpush.msra.mxu0 0.0
  %153 = vmatpush.msra.mxu0 0.0
  %154 = vmatpush.msra.mxu0 0.0
  %155 = vmatpush.msra.mxu0 0.0
  %156 = vmatpush.msra.mxu0 0.0
  %157 = vmatpush.msra.mxu0 0.0
  %158 = vmatpush.msra.mxu0 0.0
  %159 = vmatpush.msra.mxu0 0.0
  %160 = vmatpush.msra.mxu0 0.0
  %161 = vmatpush.msra.mxu0 0.0
  %162 = vmatpush.msra.mxu0 0.0
  %163 = vmatpush.msra.mxu0 0.0
  %164 = vmatpush.msra.mxu0 %v145
  %165 = vmatpush.msra.mxu0 %v144
  %166 = vmatpush.msra.mxu0 %v143
  %167 = vmatpush.msra.mxu0 %v142
  %168 = vmatmul.f32.gmra.mxu0 %v150
  %v169 = vpop.f32.mrf.mxu0
  %v170 = vadd.f32 0.0, %v169
  %171 = vdwg.mxu0
  %v172 = vadd.f32 %v147, %v170
  %v173 = vmax.f32 %v172, 0.0
  %174 = vst.msk [vmem:[%s6] sm:$0x3] %vm133, %v173
  %s175 = scalar_lea.vmem [#allocation2], 2
  %v176 = vld [vmem:[%s175] sm:$0x3]
  %v178 = vsel %vm148, %v173, 0
  %180 = vmatpush.msra.mxu0 0.0
  %181 = vmatpush.msra.mxu0 0.0
  %182 = vmatpush.msra.mxu0 0.0
  %183 = vmatpush.msra.mxu0 0.0
  %184 = vmatpush.msra.mxu0 0.0
  %185 = vmatpush.msra.mxu0 0.0
  %186 = vmatpush.msra.mxu0 0.0
  %187 = vmatpush.msra.mxu0 0.0
  %188 = vmatpush.msra.mxu0 0.0
  %189 = vmatpush.msra.mxu0 0.0
  %190 = vmatpush.msra.mxu0 0.0
  %191 = vmatpush.msra.mxu0 0.0
  %192 = vmatpush.msra.mxu0 %v145
  %193 = vmatpush.msra.mxu0 %v144
  %194 = vmatpush.msra.mxu0 %v143
  %195 = vmatpush.msra.mxu0 %v142
  %196 = vmatmul.f32.gmra.mxu0 %v178
  %v197 = vpop.f32.mrf.mxu0
  %v198 = vadd.f32 0.0, %v197
  %199 = vdwg.mxu0
  %v200 = vadd.f32 %v176, %v198
  %v201 = vmax.f32 %v200, 0.0
  %s202 = scalar_lea.vmem %s6, 2
  %203 = vst.msk [vmem:[%s202] sm:$0x3] %vm133, %v201
  %s204 = scalar_lea.vmem [#allocation2], 4
  %v205 = vld [vmem:[%s204] sm:$0x3]
  %v207 = vsel %vm148, %v201, 0
  %209 = vmatpush.msra.mxu0 0.0
  %210 = vmatpush.msra.mxu0 0.0
  %211 = vmatpush.msra.mxu0 0.0
  %212 = vmatpush.msra.mxu0 0.0
  %213 = vmatpush.msra.mxu0 0.0
  %214 = vmatpush.msra.mxu0 0.0
  %215 = vmatpush.msra.mxu0 0.0
  %216 = vmatpush.msra.mxu0 0.0
  %217 = vmatpush.msra.mxu0 0.0
  %218 = vmatpush.msra.mxu0 0.0
  %219 = vmatpush.msra.mxu0 0.0
  %220 = vmatpush.msra.mxu0 0.0
  %221 = vmatpush.msra.mxu0 %v145
  %222 = vmatpush.msra.mxu0 %v144
  %223 = vmatpush.msra.mxu0 %v143
  %224 = vmatpush.msra.mxu0 %v142
  %225 = vmatmul.f32.gmra.mxu0 %v207
  %v226 = vpop.f32.mrf.mxu0
  %v227 = vadd.f32 0.0, %v226
  %228 = vdwg.mxu0
  %v229 = vadd.f32 %v205, %v227
  %v230 = vmax.f32 %v229, 0.0
  %s231 = scalar_lea.vmem %s6, 4
  %232 = vst.msk [vmem:[%s231] sm:$0x3] %vm133, %v230
  %s233 = scalar_lea.vmem [#allocation2], 6
  %v234 = vld [vmem:[%s233] sm:$0x3]
  %v236 = vsel %vm148, %v230, 0
  %238 = vmatpush.msra.mxu0 0.0
  %239 = vmatpush.msra.mxu0 0.0
  %240 = vmatpush.msra.mxu0 0.0
  %241 = vmatpush.msra.mxu0 0.0
  %242 = vmatpush.msra.mxu0 0.0
  %243 = vmatpush.msra.mxu0 0.0
  %244 = vmatpush.msra.mxu0 0.0
  %245 = vmatpush.msra.mxu0 0.0
  %246 = vmatpush.msra.mxu0 0.0
  %247 = vmatpush.msra.mxu0 0.0
  %248 = vmatpush.msra.mxu0 0.0
  %249 = vmatpush.msra.mxu0 0.0
  %250 = vmatpush.msra.mxu0 %v145
  %251 = vmatpush.msra.mxu0 %v144
  %252 = vmatpush.msra.mxu0 %v143
  %253 = vmatpush.msra.mxu0 %v142
  %254 = vmatmul.f32.gmra.mxu0 %v236
  %v255 = vpop.f32.mrf.mxu0
  %v256 = vadd.f32 0.0, %v255
  %257 = vdwg.mxu0
  %v258 = vadd.f32 %v234, %v256
  %v259 = vmax.f32 %v258, 0.0
  %s260 = scalar_lea.vmem %s6, 6
  %261 = vst.msk [vmem:[%s260] sm:$0x3] %vm133, %v259
  %s262 = scalar_lea.vmem [#allocation2], 8
  %v263 = vld [vmem:[%s262] sm:$0x3]
  %v265 = vsel %vm148, %v259, 0
  %267 = vmatpush.msra.mxu0 0.0
  %268 = vmatpush.msra.mxu0 0.0
  %269 = vmatpush.msra.mxu0 0.0
  %270 = vmatpush.msra.mxu0 0.0
  %271 = vmatpush.msra.mxu0 0.0
  %272 = vmatpush.msra.mxu0 0.0
  %273 = vmatpush.msra.mxu0 0.0
  %274 = vmatpush.msra.mxu0 0.0
  %275 = vmatpush.msra.mxu0 0.0
  %276 = vmatpush.msra.mxu0 0.0
  %277 = vmatpush.msra.mxu0 0.0
  %278 = vmatpush.msra.mxu0 0.0
  %279 = vmatpush.msra.mxu0 %v145
  %280 = vmatpush.msra.mxu0 %v144
  %281 = vmatpush.msra.mxu0 %v143
  %282 = vmatpush.msra.mxu0 %v142
  %283 = vmatmul.f32.gmra.mxu0 %v265
  %v284 = vpop.f32.mrf.mxu0
  %v285 = vadd.f32 0.0, %v284
  %286 = vdwg.mxu0
  %v287 = vadd.f32 %v263, %v285
  %v288 = vmax.f32 %v287, 0.0
  %s289 = scalar_lea.vmem %s6, 8
  %290 = vst.msk [vmem:[%s289] sm:$0x3] %vm133, %v288
  %s291 = scalar_lea.vmem [#allocation2], 10
  %v292 = vld [vmem:[%s291] sm:$0x3]
  %v294 = vsel %vm148, %v288, 0
  %296 = vmatpush.msra.mxu0 0.0
  %297 = vmatpush.msra.mxu0 0.0
  %298 = vmatpush.msra.mxu0 0.0
  %299 = vmatpush.msra.mxu0 0.0
  %300 = vmatpush.msra.mxu0 0.0
  %301 = vmatpush.msra.mxu0 0.0
  %302 = vmatpush.msra.mxu0 0.0
  %303 = vmatpush.msra.mxu0 0.0
  %304 = vmatpush.msra.mxu0 0.0
  %305 = vmatpush.msra.mxu0 0.0
  %306 = vmatpush.msra.mxu0 0.0
  %307 = vmatpush.msra.mxu0 0.0
  %308 = vmatpush.msra.mxu0 %v145
  %309 = vmatpush.msra.mxu0 %v144
  %310 = vmatpush.msra.mxu0 %v143
  %311 = vmatpush.msra.mxu0 %v142
  %312 = vmatmul.f32.gmra.mxu0 %v294
  %v313 = vpop.f32.mrf.mxu0
  %v314 = vadd.f32 0.0, %v313
  %315 = vdwg.mxu0
  %v316 = vadd.f32 %v292, %v314
  %v317 = vmax.f32 %v316, 0.0
  %s318 = scalar_lea.vmem %s6, 10
  %319 = vst.msk [vmem:[%s318] sm:$0x3] %vm133, %v317
  %s320 = scalar_lea.vmem [#allocation2], 12
  %v321 = vld [vmem:[%s320] sm:$0x3]
  %v323 = vsel %vm148, %v317, 0
  %325 = vmatpush.msra.mxu0 0.0
  %326 = vmatpush.msra.mxu0 0.0
  %327 = vmatpush.msra.mxu0 0.0
  %328 = vmatpush.msra.mxu0 0.0
  %329 = vmatpush.msra.mxu0 0.0
  %330 = vmatpush.msra.mxu0 0.0
  %331 = vmatpush.msra.mxu0 0.0
  %332 = vmatpush.msra.mxu0 0.0
  %333 = vmatpush.msra.mxu0 0.0
  %334 = vmatpush.msra.mxu0 0.0
  %335 = vmatpush.msra.mxu0 0.0
  %336 = vmatpush.msra.mxu0 0.0
  %337 = vmatpush.msra.mxu0 %v145
  %338 = vmatpush.msra.mxu0 %v144
  %339 = vmatpush.msra.mxu0 %v143
  %340 = vmatpush.msra.mxu0 %v142
  %341 = vmatmul.f32.gmra.mxu0 %v323
  %v342 = vpop.f32.mrf.mxu0
  %v343 = vadd.f32 0.0, %v342
  %344 = vdwg.mxu0
  %v345 = vadd.f32 %v321, %v343
  %v346 = vmax.f32 %v345, 0.0
  %s347 = scalar_lea.vmem %s6, 12
  %348 = vst.msk [vmem:[%s347] sm:$0x3] %vm133, %v346
  %s349 = scalar_lea.vmem [#allocation2], 14
  %v350 = vld [vmem:[%s349] sm:$0x3]
  %v352 = vsel %vm148, %v346, 0
  %354 = vmatpush.msra.mxu0 0.0
  %355 = vmatpush.msra.mxu0 0.0
  %356 = vmatpush.msra.mxu0 0.0
  %357 = vmatpush.msra.mxu0 0.0
  %358 = vmatpush.msra.mxu0 0.0
  %359 = vmatpush.msra.mxu0 0.0
  %360 = vmatpush.msra.mxu0 0.0
  %361 = vmatpush.msra.mxu0 0.0
  %362 = vmatpush.msra.mxu0 0.0
  %363 = vmatpush.msra.mxu0 0.0
  %364 = vmatpush.msra.mxu0 0.0
  %365 = vmatpush.msra.mxu0 0.0
  %366 = vmatpush.msra.mxu0 %v145
  %367 = vmatpush.msra.mxu0 %v144
  %368 = vmatpush.msra.mxu0 %v143
  %369 = vmatpush.msra.mxu0 %v142
  %370 = vmatmul.f32.gmra.mxu0 %v352
  %v371 = vpop.f32.mrf.mxu0
  %v372 = vadd.f32 0.0, %v371
  %373 = vdwg.mxu0
  %v374 = vadd.f32 %v350, %v372
  %v375 = vmax.f32 %v374, 0.0
  %s376 = scalar_lea.vmem %s6, 14
  %377 = vst.msk [vmem:[%s376] sm:$0x3] %vm133, %v375
  %378 = vst.msk [vmem:[#allocation3] sm:$0x3] %vm133, %v375
  %v379 = vld [vmem:[%s6] sm:$0x3]
  %v380 = vld [vmem:[%s6 + $0x2] sm:$0x3]
  %v381 = vld [vmem:[%s6 + $0x4] sm:$0x3]
  %v382 = vld [vmem:[%s6 + $0x6] sm:$0x3]
  %v383 = vld [vmem:[%s6 + $0x8] sm:$0x3]
  %v384 = vld [vmem:[%s6 + $0xa] sm:$0x3]
  %v385 = vld [vmem:[%s6 + $0xc] sm:$0x3]
  %v386 = vld [vmem:[%s6 + $0xe] sm:$0x3]
  %v387 = vld [vmem:[%s4] sm:$0xff]
  %v388 = vld [vmem:[%s4 + $0x8] sm:$0xff]
  %v389 = vld [vmem:[%s4 + $0x10] sm:$0xff]
  %v390 = vld [vmem:[%s4 + $0x18] sm:$0xff]
  %v391 = vld [vmem:[%s5] sm:$0x1]
  %v393 = vperm.slane %v391, 0
  %402 = vst [vmem:[#allocation1] ss:$4 sm:$0xff] %v379
  %s403 = scalar_lea.vmem [#allocation1], 1
  %404 = vst [vmem:[%s403] ss:$4 sm:$0xff] %v380
  %s405 = scalar_lea.vmem [#allocation1], 2
  %406 = vst [vmem:[%s405] ss:$4 sm:$0xff] %v381
  %s407 = scalar_lea.vmem [#allocation1], 3
  %408 = vst [vmem:[%s407] ss:$4 sm:$0xff] %v382
  %s409 = scalar_lea.vmem [#allocation1], 32
  %410 = vst [vmem:[%s409] ss:$4 sm:$0xff] %v383
  %s411 = scalar_lea.vmem [#allocation1], 33
  %412 = vst [vmem:[%s411] ss:$4 sm:$0xff] %v384
  %s413 = scalar_lea.vmem [#allocation1], 34
  %414 = vst [vmem:[%s413] ss:$4 sm:$0xff] %v385
  %s415 = scalar_lea.vmem [#allocation1], 35
  %416 = vst [vmem:[%s415] ss:$4 sm:$0xff] %v386
  %v417 = vld.sshfl [vmem:[#allocation1] sm:$0xff pattern:$0x73625140]
  %v418 = vld.sshfl [vmem:[#allocation1 + $0x20] sm:$0xff pattern:$0x73625140]
  %419 = vst [vmem:[#allocation1] ss:$4 sm:$0xff] %v393
  %s420 = scalar_lea.vmem [#allocation1], 1
  %421 = vst [vmem:[%s420] ss:$4 sm:$0xff] %v393
  %s422 = scalar_lea.vmem [#allocation1], 2
  %423 = vst [vmem:[%s422] ss:$4 sm:$0xff] %v393
  %s424 = scalar_lea.vmem [#allocation1], 3
  %425 = vst [vmem:[%s424] ss:$4 sm:$0xff] %v393
  %s426 = scalar_lea.vmem [#allocation1], 32
  %427 = vst [vmem:[%s426] ss:$4 sm:$0xff] %v393
  %s428 = scalar_lea.vmem [#allocation1], 33
  %429 = vst [vmem:[%s428] ss:$4 sm:$0xff] %v393
  %s430 = scalar_lea.vmem [#allocation1], 34
  %431 = vst [vmem:[%s430] ss:$4 sm:$0xff] %v393
  %s432 = scalar_lea.vmem [#allocation1], 35
  %433 = vst [vmem:[%s432] ss:$4 sm:$0xff] %v393
  %v434 = vld.sshfl [vmem:[#allocation1] sm:$0xff pattern:$0x73625140]
  %v435 = vld.sshfl [vmem:[#allocation1 + $0x20] sm:$0xff pattern:$0x73625140]
  %v438 = vsel %vm148, %v417, 0
  %v440 = vsel %vm148, %v418, 0
  %442 = vmatpush.msra.mxu0 0.0
  %443 = vmatpush.msra.mxu0 0.0
  %444 = vmatpush.msra.mxu0 0.0
  %445 = vmatpush.msra.mxu0 0.0
  %446 = vmatpush.msra.mxu0 0.0
  %447 = vmatpush.msra.mxu0 0.0
  %448 = vmatpush.msra.mxu0 0.0
  %449 = vmatpush.msra.mxu0 0.0
  %450 = vmatpush.msra.mxu0 0.0
  %451 = vmatpush.msra.mxu0 0.0
  %452 = vmatpush.msra.mxu0 0.0
  %453 = vmatpush.msra.mxu0 0.0
  %454 = vmatpush.msra.mxu0 %v390
  %455 = vmatpush.msra.mxu0 %v389
  %456 = vmatpush.msra.mxu0 %v388
  %457 = vmatpush.msra.mxu0 %v387
  %458 = vmatmul.f32.gmra.mxu0 %v438
  %v459 = vpop.f32.mrf.mxu0
  %v460 = vadd.f32 %v434, %v459
  %461 = vmatmul.f32.gmra.mxu0 %v440
  %v462 = vpop.f32.mrf.mxu0
  %v463 = vadd.f32 %v435, %v462
  %464 = vdwg.mxu0
  %v467 = vrot.slane %v460, 2
  %v468 = vrot.slane %v460, 4
  %v469 = vrot.slane %v460, 6
  %v470 = vrot.slane %v463, 2
  %v471 = vrot.slane %v463, 4
  %v472 = vrot.slane %v463, 6
  %479 = vst.msk [vmem:[%s7] sm:$0x3] %vm133, %v460
  %480 = vst.msk [vmem:[%s7 + $0x2] sm:$0x3] %vm133, %v467
  %481 = vst.msk [vmem:[%s7 + $0x4] sm:$0x3] %vm133, %v468
  %482 = vst.msk [vmem:[%s7 + $0x6] sm:$0x3] %vm133, %v469
  %483 = vst.msk [vmem:[%s7 + $0x8] sm:$0x3] %vm133, %v463
  %484 = vst.msk [vmem:[%s7 + $0xa] sm:$0x3] %vm133, %v470
  %485 = vst.msk [vmem:[%s7 + $0xc] sm:$0x3] %vm133, %v471
  %486 = vst.msk [vmem:[%s7 + $0xe] sm:$0x3] %vm133, %v472
  // Predicated region
  $region30: #{rnn_forward.1} parent=0 // pred_check
    _
  $region31: #{rnn_forward.1} parent=0 // pred_check_branch
    %488 = sbr.rel (0) target = $region33
  $region32: #{rnn_forward.1} parent=0 // pred_region
    _
  $region33: #{rnn_forward.1} parent=0 // pred_fallthru
    _
  // Predicated region
  $region34: #{rnn_forward.1} parent=0 // pred_check
    _
  $region35: #{rnn_forward.1} parent=0 // pred_check_branch
    %490 = sbr.rel (0) target = $region37
  $region36: #{rnn_forward.1} parent=0 // pred_region
    _
  $region37: #{rnn_forward.1} parent=0 // pred_fallthru
    _
  // Predicated region
  $region38: #{rnn_forward.1} parent=0 // pred_check
    _
  $region39: #{rnn_forward.1} parent=0 // pred_check_branch
    %492 = sbr.rel (0) target = $region41
  $region40: #{rnn_forward.1} parent=0 // pred_region
    _
  $region41: #{rnn_forward.1} parent=0 // pred_fallthru
    _
  // Predicated region
  $region42: #{rnn_forward.1} parent=0 // pred_check
    _
  $region43: #{rnn_forward.1} parent=0 // pred_check_branch
    %494 = sbr.rel (0) target = $region45
  $region44: #{rnn_forward.1} parent=0 // pred_region
    _
  $region45: #{rnn_forward.1} parent=0 // pred_fallthru
    _

</llo_original>
